<compile_context>
chip_gen: v7x
topology: tpu7x:2x2x1
jax: 0.10.0
libtpu: 0.0.40
codegen_flags: <defaults>
</compile_context>

<pallas_src>
import functools

import jax
import jax.numpy as jnp
import numpy as np
from jax.experimental import pallas as pl
from jax.experimental.pallas import tpu as pltpu


def _relation_crossing_kernel(x_ref, wbd_ref, expand_ref, o_ref, *, negative_slope):
    # x_ref:      (R, TN, F)  node features, storage dtype (F = H*D on lanes)
    # wbd_ref:    (F, H)      block-diagonal attention weight (bf16)
    # expand_ref: (H, F)      one-hot head -> lane expansion matrix (bf16)
    # o_ref:      (TN, F)
    R, TN, F = x_ref.shape
    x = x_ref[...]                                            # load block once

    # --- fused per-head logits: ONE (R*TN, F) @ (F, H) MXU matmul ---------
    # bf16 operands => single MXU pass; f32 accumulation for the logits.
    x_flat_bf16 = x.reshape(R * TN, F).astype(jnp.bfloat16)
    logits = jnp.dot(x_flat_bf16, wbd_ref[...],
                     preferred_element_type=jnp.float32)      # (R*TN, H)
    logits = jnp.where(logits >= 0, logits, negative_slope * logits)
    logits = logits.reshape(R, TN, logits.shape[-1])          # (R, TN, H)

    # --- numerically stable softmax over relations (tiny f32 slabs) -------
    m = jnp.max(logits, axis=0, keepdims=True)                # (1, TN, H)
    e = jnp.exp(logits - m)                                   # (R, TN, H)
    denom = jnp.sum(e, axis=0, keepdims=True)                 # (1, TN, H)
    attn = e * pl.reciprocal(denom, approx=True)              # (R, TN, H) f32

    # --- fused broadcast of per-head attention to full lane width ---------
    # ONE (R*TN, H) @ (H, F) one-hot matmul (expand matrix is exact in bf16).
    a_full = jnp.dot(attn.reshape(R * TN, -1).astype(jnp.bfloat16),
                     expand_ref[...],
                     preferred_element_type=jnp.float32).reshape(R, TN, F)

    # --- weighted sum over relations, f32 accumulation, one cast at store -
    out = jnp.sum(x.astype(jnp.float32) * a_full, axis=0)     # (TN, F)
    o_ref[...] = out.astype(o_ref.dtype)


def _vmem_ceiling_bytes():
    """Per-chip VMEM ceiling with ~25% headroom for compiler scratch/spill."""
    try:
        cap = int(getattr(pltpu.get_tpu_info(), "vmem_capacity_bytes",
                          64 * 1024 * 1024))
    except Exception:
        cap = 64 * 1024 * 1024                    # conservative (v7x-sized)
    return max(16 * 1024 * 1024, (cap * 3) // 4)  # 48 MiB v7x, 96 MiB v5e/v6e


def relation_crossing(dsttype_node_features, relations_crossing_attention_weight,
                      num_heads, out_feats, negative_slope=0.2, node_tile=None):
    """
    dsttype_node_features: (R, N, H*D)
    relations_crossing_attention_weight: (H, D)
    returns: (N, H*D)   (== squeeze(0) of x when R == 1)
    """
    x = dsttype_node_features
    R = x.shape[0]
    if R == 1:
        # PyTorch path: squeeze(dim=0), no attention / reshape.
        return jnp.squeeze(x, axis=0)

    H, D = num_heads, out_feats
    F = H * D
    N = x.shape[1]
    assert x.shape[2] == F, "feature dim must be num_heads * out_feats"

    dtype = x.dtype
    itemsize = jnp.dtype(dtype).itemsize
    vmem_ceiling = _vmem_ceiling_bytes()

    # --- node-tile selection -------------------------------------------------
    if node_tile is None:
        # Live bytes per node row: double-buffered input (R,TN,F) + output
        # (TN,F) blocks, plus in-kernel bf16 matmul operand and f32 temporaries
        # (a_full, f32 x upcast, f32 accumulator).
        row_bytes = F * (2 * (R + 1) * itemsize + (2 * R + 1) * 4 + R * 2)
        node_tile = (vmem_ceiling // 3) // max(row_bytes, 1)
    TN = int(node_tile)
    # Keep >= 4 grid steps so both v7x TensorCores get >= 2 pipelined steps
    # each (also preserves double-buffering overlap on v5e/v6e).
    TN = min(TN, max(8, ((N // 4) // 8) * 8))
    TN = min(max(8, (TN // 8) * 8), 4096)

    # Ragged last block handled by Pallas: padded reads, masked writes.
    # (All math is per-node/row-local, so edge-padding garbage never mixes in.)
    grid = pl.cdiv(N, TN)

    # --- small host-built matrices for the MXU formulation (bf16, single-pass)
    w = relations_crossing_attention_weight.astype(jnp.bfloat16)
    eye = jnp.eye(H, dtype=jnp.bfloat16)
    # Block-diagonal weight (F, H): column h holds w[h] in rows h*D:(h+1)*D.
    wbd = (w[:, :, None] * eye[:, None, :]).reshape(F, H)
    # One-hot expansion (H, F): row h is 1 on lanes h*D:(h+1)*D (exact in bf16).
    expand = jnp.repeat(eye, D, axis=1)

    kernel = functools.partial(_relation_crossing_kernel,
                               negative_slope=negative_slope)

    out = pl.pallas_call(
        kernel,
        out_shape=jax.ShapeDtypeStruct((N, F), dtype),
        grid_spec=pltpu.PrefetchScalarGridSpec(
            num_scalar_prefetch=0,
            grid=(grid,),
            in_specs=[
                pl.BlockSpec((R, TN, F), lambda i: (0, i, 0)),
                pl.BlockSpec((F, H), lambda i: (0, 0)),
                pl.BlockSpec((H, F), lambda i: (0, 0)),
            ],
            out_specs=pl.BlockSpec((TN, F), lambda i: (i, 0)),
        ),
        compiler_params=pltpu.CompilerParams(
            dimension_semantics=("parallel",),
            vmem_limit_bytes=int(vmem_ceiling)),
    )(x, wbd, expand)

    # TODO(synk): nn.Dropout(p=0.0) is an identity (eval semantics); stochastic
    # training-mode dropout is not implemented.
    return out


def _reference(x, w, num_heads, out_feats, negative_slope=0.2):
    """Pure-JAX reference mirroring the PyTorch forward."""
    R = x.shape[0]
    if R == 1:
        return jnp.squeeze(x, axis=0)
    H, D = num_heads, out_feats
    xf = x.reshape(R, -1, H, D)
    attn = jnp.sum(xf * w, axis=-1, keepdims=True)
    attn = jnp.where(attn >= 0, attn, negative_slope * attn)
    attn = jax.nn.softmax(attn, axis=0)
    out = jnp.sum(xf * attn, axis=0)
    return out.reshape(-1, H * D)


if __name__ == "__main__":
    R, H, D = 3, 4, 32            # relations, heads, hidden-per-head
    F = H * D
    key = jax.random.PRNGKey(0)
    kx, kw, kx2 = jax.random.split(key, 3)

    # bf16-representable f32 values: the bf16 MXU logits matmul is then exact,
    # keeping the correctness check meaningful.
    w = jax.random.normal(kw, (H, D), dtype=jnp.float32) * 0.1
    w = w.astype(jnp.bfloat16).astype(jnp.float32)

    # 1) explicit small node tile -> multi-step grid with a ragged last block.
    N = 20
    x = jax.random.normal(kx, (R, N, F), dtype=jnp.float32)
    x = x.astype(jnp.bfloat16).astype(jnp.float32)
    out = jax.block_until_ready(
        relation_crossing(x, w, num_heads=H, out_feats=D,
                          negative_slope=0.2, node_tile=8))
    ref = jax.block_until_ready(_reference(x, w, H, D, 0.2))
    assert out.shape == (N, F)
    np.testing.assert_allclose(np.asarray(out), np.asarray(ref),
                               rtol=1e-2, atol=1e-2)

    # 2) default tile selection, larger (still non-aligned-friendly) N.
    N2 = 200
    x2 = jax.random.normal(kx2, (R, N2, F), dtype=jnp.float32)
    x2 = x2.astype(jnp.bfloat16).astype(jnp.float32)
    out2 = jax.block_until_ready(
        relation_crossing(x2, w, num_heads=H, out_feats=D))
    ref2 = jax.block_until_ready(_reference(x2, w, H, D, 0.2))
    assert out2.shape == (N2, F)
    np.testing.assert_allclose(np.asarray(out2), np.asarray(ref2),
                               rtol=1e-2, atol=1e-2)

    # 3) single-relation (squeeze) path.
    x1 = x[:1]
    out1 = jax.block_until_ready(
        relation_crossing(x1, w, num_heads=H, out_feats=D))
    np.testing.assert_allclose(np.asarray(out1), np.asarray(x1[0]),
                               rtol=0, atol=0)

    print("KERNEL_OK")
</pallas_src>

<mosaic_0001>
module attributes {stable_mosaic.version = 11 : i64} {
  func.func @_relation_crossing_kernel(%arg0: i32, %arg1: memref<3x8x128xf32, #tpu.memory_space<vmem>>, %arg2: memref<128x4xbf16, #tpu.memory_space<vmem>>, %arg3: memref<4x128xbf16, #tpu.memory_space<vmem>>, %arg4: memref<8x128xf32, #tpu.memory_space<vmem>>) attributes {dimension_semantics = [#tpu.dimension_semantics<parallel>], iteration_bounds = array<i64: 3>, scalar_prefetch = 0 : i64, scratch_operands = 0 : i64, tpu.core_type = #tpu.core_type<tc>, window_params = [{transform_indices = @transform_0, window_bounds = array<i64: 3, 8, 128>}, {pipeline_mode = #tpu.pipeline_mode<synchronous>, transform_indices = @transform_1, window_bounds = array<i64: 128, 4>}, {pipeline_mode = #tpu.pipeline_mode<synchronous>, transform_indices = @transform_2, window_bounds = array<i64: 4, 128>}, {transform_indices = @transform_3, window_bounds = array<i64: 8, 128>}]} {
    %c0 = arith.constant 0 : index
    %c0_0 = arith.constant 0 : index
    %c0_1 = arith.constant 0 : index
    %0 = vector.load %arg1[%c0, %c0_0, %c0_1] : memref<3x8x128xf32, #tpu.memory_space<vmem>>, vector<3x8x128xf32>
    %1 = vector.shape_cast %0 : vector<3x8x128xf32> to vector<24x128xf32>
    %2 = arith.truncf %1 : vector<24x128xf32> to vector<24x128xbf16>
    %c0_2 = arith.constant 0 : index
    %c0_3 = arith.constant 0 : index
    %3 = vector.load %arg2[%c0_2, %c0_3] : memref<128x4xbf16, #tpu.memory_space<vmem>>, vector<128x4xbf16>
    %cst = arith.constant dense<0.000000e+00> : vector<24x4xf32>
    %4 = tpu.matmul %2, %3, %cst {dimension_numbers = #tpu.dot_dimension_numbers<[1], [0], [0], [1], [0, 0, 1, 1], [], []>} : vector<24x128xbf16>, vector<128x4xbf16>, vector<24x4xf32> -> vector<24x4xf32>
    %cst_4 = arith.constant 0.000000e+00 : f32
    %5 = vector.broadcast %cst_4 : f32 to vector<24x4xf32>
    %6 = arith.cmpf oge, %4, %5 : vector<24x4xf32>
    %cst_5 = arith.constant 2.000000e-01 : f32
    %7 = vector.broadcast %cst_5 : f32 to vector<24x4xf32>
    %8 = arith.mulf %7, %4 : vector<24x4xf32>
    %9 = arith.select %6, %4, %8 : vector<24x4xi1>, vector<24x4xf32>
    %10 = vector.shape_cast %9 : vector<24x4xf32> to vector<3x8x4xf32>
    %cst_6 = arith.constant dense<0xFF800000> : vector<8x4xf32>
    %11 = vector.multi_reduction <maximumf>, %10, %cst_6 [0] : vector<3x8x4xf32> to vector<8x4xf32>
    %12 = vector.shape_cast %11 : vector<8x4xf32> to vector<1x8x4xf32>
    %13 = vector.broadcast %12 : vector<1x8x4xf32> to vector<3x8x4xf32>
    %14 = arith.subf %10, %13 : vector<3x8x4xf32>
    %15 = math.exp %14 : vector<3x8x4xf32>
    %cst_7 = arith.constant dense<0.000000e+00> : vector<8x4xf32>
    %16 = vector.multi_reduction <add>, %15, %cst_7 [0] : vector<3x8x4xf32> to vector<8x4xf32>
    %17 = vector.shape_cast %16 : vector<8x4xf32> to vector<1x8x4xf32>
    %18 = tpu.reciprocal %17 {approx = true} : vector<1x8x4xf32> -> vector<1x8x4xf32>
    %19 = vector.broadcast %18 : vector<1x8x4xf32> to vector<3x8x4xf32>
    %20 = arith.mulf %15, %19 : vector<3x8x4xf32>
    %21 = vector.shape_cast %20 : vector<3x8x4xf32> to vector<24x4xf32>
    %22 = arith.truncf %21 : vector<24x4xf32> to vector<24x4xbf16>
    %c0_8 = arith.constant 0 : index
    %c0_9 = arith.constant 0 : index
    %23 = vector.load %arg3[%c0_8, %c0_9] : memref<4x128xbf16, #tpu.memory_space<vmem>>, vector<4x128xbf16>
    %cst_10 = arith.constant dense<0.000000e+00> : vector<24x128xf32>
    %24 = tpu.matmul %22, %23, %cst_10 {dimension_numbers = #tpu.dot_dimension_numbers<[1], [0], [0], [1], [0, 0, 1, 1], [], []>} : vector<24x4xbf16>, vector<4x128xbf16>, vector<24x128xf32> -> vector<24x128xf32>
    %25 = vector.shape_cast %24 : vector<24x128xf32> to vector<3x8x128xf32>
    %26 = arith.mulf %0, %25 : vector<3x8x128xf32>
    %cst_11 = arith.constant dense<0.000000e+00> : vector<8x128xf32>
    %27 = vector.multi_reduction <add>, %26, %cst_11 [0] : vector<3x8x128xf32> to vector<8x128xf32>
    %c0_12 = arith.constant 0 : index
    %c0_13 = arith.constant 0 : index
    %28 = vector.load %arg4[%c0_12, %c0_13] : memref<8x128xf32, #tpu.memory_space<vmem>>, vector<8x128xf32>
    tpu.vector_store %arg4[%c0_12, %c0_13], %27 {strides = array<i32>} : memref<8x128xf32, #tpu.memory_space<vmem>>, vector<8x128xf32>,
    return
  }
  func.func @transform_0(%arg0: i32) -> (i32, i32, i32) {
    %c0_i32 = arith.constant 0 : i32
    %c0_i32_0 = arith.constant 0 : i32
    %c0_i32_1 = arith.constant 0 : i32
    return %c0_i32, %arg0, %c0_i32_0 : i32, i32, i32
  }
  func.func @transform_1(%arg0: i32) -> (i32, i32) {
    %c0_i32 = arith.constant 0 : i32
    %c0_i32_0 = arith.constant 0 : i32
    %c0_i32_1 = arith.constant 0 : i32
    return %c0_i32, %c0_i32_0 : i32, i32
  }
  func.func @transform_2(%arg0: i32) -> (i32, i32) {
    %c0_i32 = arith.constant 0 : i32
    %c0_i32_0 = arith.constant 0 : i32
    %c0_i32_1 = arith.constant 0 : i32
    return %c0_i32, %c0_i32_0 : i32, i32
  }
  func.func @transform_3(%arg0: i32) -> (i32, i32) {
    %c0_i32 = arith.constant 0 : i32
    %c0_i32_0 = arith.constant 0 : i32
    return %arg0, %c0_i32 : i32, i32
  }
}

</mosaic_0001>

<llo_original>
// kernel: tpu_custom_call.1
$region0: #{tpu_custom_call.1}
  #allocation0 [shape = 'u32[]', space=smem, size = 0x4, offset = 0x4, fixed_abs, tag = 'smem constant byte address 0x4 - core index']
  #allocation1 [shape = 'u32[144,128]{1,0:T(1,128)}', space=vmem, size = 0x12000, scoped, tag = 'internal scratch']
  %s0 = inlined_call_operand.hbm [shape: f32[3,20,128], index: 0, kind: input, shape index: {}]
  %s1 = inlined_call_operand.vmem [shape: bf16[128,4], index: 1, kind: input, shape index: {}]
  %s2 = inlined_call_operand.vmem [shape: bf16[4,128], index: 2, kind: input, shape index: {}]
  %s3 = inlined_call_operand.hbm [shape: f32[20,128], index: 3, kind: output, shape index: {}]
  %s4 = sld [smem:[#allocation0]]
  $region49: #{tpu_custom_call.1} parent=0
    _
  %s6 = ssub.s32 1, %s4
  %s7 = scalar_select 0, %s6, %s4
  $region1: #{tpu_custom_call.1} parent=0
    #allocation2 [shape = 'u8[24576]{0}', space=vmem, size = 0x6000, scoped, tag = 'input window, operand 0']
    #allocation3 [shape = 's32[2]{0}', space=sflag, size = 0x8, scoped, tag = 'scoped memory for tpu_custom_call.1']
    #allocation4 [shape = 's32[2]{0}', space=sflag, size = 0x8, scoped, tag = 'scoped memory for tpu_custom_call.1']
    #allocation5 [shape = 'u8[8192]{0}', space=vmem, size = 0x2000, scoped, tag = 'output window, operand 0']
    %8 = vsyncpa [#allocation3], 0
    %s9 = scalar_lea.sflag [#allocation3], 1
    %10 = vsyncpa %s9, 0
    %11 = vsyncpa [#allocation4], 0
    %s12 = scalar_lea.sflag [#allocation4], 1
    %13 = vsyncpa %s12, 0
    loop: start=0, step=1, limit=5
    $region2: #{tpu_custom_call.1} parent=1 // loop_pre_header
      _
    $region3: #{tpu_custom_call.1} parent=1 // loop_header
      %s15 = sphi 0, %s19
      %p16 = scmp.ge.s32.totalorder %s15, 5
      %s25 = sphi 0, %s27
      %s28 = sphi 0, %s25
      %s29 = sphi 0, %s28
      %s45 = sphi 0, %s29
      %s49 = sphi 0, %s49
      %s51 = sphi 0, %s49
      %s52 = sphi 0, %s51
      %s66 = sphi 0, %s52
      %s70 = sphi 0, %s70
      %s72 = sphi 0, %s70
      %s73 = sphi 0, %s72
      %s87 = sphi 0, %s73
      %s93 = sphi 0, %s95
      %s96 = sphi 0, %s93
      %s97 = sphi 0, %s96
      %s113 = sphi 0, %s97
    $region4: #{tpu_custom_call.1} parent=1 // loop_header_branch
      %18 = sbr.rel (%p16) target = $region8
    $region5: #{tpu_custom_call.1} parent=1 // loop_body
      %s20 = ssub.s32 %s15, 1
      %s21 = ssub.s32 %s15, 2
      %s22 = sadd.s32 %s15, 1
      %s23 = ssub.s32 %s15, %s22
      %p24 = scmp.eq.s32.totalorder %s23, 0
      %s26 = sadd.s32 %s25, 1
      %s27 = scalar_select %p24, %s25, %s26
      %p30 = pneg %p24
      %p31 = scmp.eq.s32.totalorder %s15, 2
      %p32 = por %p30, %p31
      %p33 = scmp.ne.s32.totalorder %s25, %s28
      %p34 = scmp.eq.s32.totalorder %s15, 0
      %p35 = por %p33, %p34
      %p36 = scmp.ne.s32.totalorder %s25, %s28
      %p37 = scmp.eq.s32.totalorder %s20, 2
      %p38 = por %p36, %p37
      %p39 = scmp.ne.s32.totalorder %s28, %s29
      %p40 = scmp.eq.s32.totalorder %s20, 0
      %p41 = por %p39, %p40
      %p42 = scmp.ne.s32.totalorder %s28, %s29
      %p43 = scmp.eq.s32.totalorder %s21, 2
      %p44 = por %p42, %p43
      %p46 = scmp.ne.s32.totalorder %s29, %s45
      %p47 = scmp.eq.s32.totalorder %s21, 0
      %p48 = por %p46, %p47
      %s50 = sadd.s32 %s49, 1
      %p53 = scmp.eq.s32.totalorder %s15, 2
      %p54 = scmp.ne.s32.totalorder %s49, %s51
      %p55 = scmp.eq.s32.totalorder %s15, 0
      %p56 = por %p54, %p55
      %p57 = scmp.ne.s32.totalorder %s49, %s51
      %p58 = scmp.eq.s32.totalorder %s20, 2
      %p59 = por %p57, %p58
      %p60 = scmp.ne.s32.totalorder %s51, %s52
      %p61 = scmp.eq.s32.totalorder %s20, 0
      %p62 = por %p60, %p61
      %p63 = scmp.ne.s32.totalorder %s51, %s52
      %p64 = scmp.eq.s32.totalorder %s21, 2
      %p65 = por %p63, %p64
      %p67 = scmp.ne.s32.totalorder %s52, %s66
      %p68 = scmp.eq.s32.totalorder %s21, 0
      %p69 = por %p67, %p68
      %s71 = sadd.s32 %s70, 1
      %p74 = scmp.eq.s32.totalorder %s15, 2
      %p75 = scmp.ne.s32.totalorder %s70, %s72
      %p76 = scmp.eq.s32.totalorder %s15, 0
      %p77 = por %p75, %p76
      %p78 = scmp.ne.s32.totalorder %s70, %s72
      %p79 = scmp.eq.s32.totalorder %s20, 2
      %p80 = por %p78, %p79
      %p81 = scmp.ne.s32.totalorder %s72, %s73
      %p82 = scmp.eq.s32.totalorder %s20, 0
      %p83 = por %p81, %p82
      %p84 = scmp.ne.s32.totalorder %s72, %s73
      %p85 = scmp.eq.s32.totalorder %s21, 2
      %p86 = por %p84, %p85
      %p88 = scmp.ne.s32.totalorder %s73, %s87
      %p89 = scmp.eq.s32.totalorder %s21, 0
      %p90 = por %p88, %p89
      %s91 = ssub.s32 %s15, %s22
      %p92 = scmp.eq.s32.totalorder %s91, 0
      %s94 = sadd.s32 %s93, 1
      %s95 = scalar_select %p92, %s93, %s94
      %p98 = pneg %p92
      %p99 = scmp.eq.s32.totalorder %s15, 2
      %p100 = por %p98, %p99
      %p101 = scmp.ne.s32.totalorder %s93, %s96
      %p102 = scmp.eq.s32.totalorder %s15, 0
      %p103 = por %p101, %p102
      %p104 = scmp.ne.s32.totalorder %s93, %s96
      %p105 = scmp.eq.s32.totalorder %s20, 2
      %p106 = por %p104, %p105
      %p107 = scmp.ne.s32.totalorder %s96, %s97
      %p108 = scmp.eq.s32.totalorder %s20, 0
      %p109 = por %p107, %p108
      %p110 = scmp.ne.s32.totalorder %s96, %s97
      %p111 = scmp.eq.s32.totalorder %s21, 2
      %p112 = por %p110, %p111
      %p114 = scmp.ne.s32.totalorder %s97, %s113
      %p115 = scmp.eq.s32.totalorder %s21, 0
      %p116 = por %p114, %p115
      %p117 = scmp.le.s32.totalorder 1, %s15
      %p118 = scmp.lt.s32.totalorder %s15, 4
      %p119 = pnand %p117, %p118
      %p120 = pneg %p119
      // Predicated region
      $region9: #{tpu_custom_call.1} parent=5 // pred_check
        _
      $region10: #{tpu_custom_call.1} parent=5 // pred_check_branch
        %122 = sbr.rel (%p119) target = $region12
      $region11: #{tpu_custom_call.1} parent=5 // pred_region
        %s123 = ssub.s32 %s15, 1
        // Predicated region
        $region13: #{tpu_custom_call.1} parent=11 // pred_check
          %p124 = pneg %p62
        $region14: #{tpu_custom_call.1} parent=11 // pred_check_branch
          %126 = sbr.rel (%p124) target = $region16
        $region15: #{tpu_custom_call.1} parent=11 // pred_region
          _
        $region16: #{tpu_custom_call.1} parent=11 // pred_fallthru
          _
        // Predicated region
        $region17: #{tpu_custom_call.1} parent=11 // pred_check
          %p127 = pneg %p83
        $region18: #{tpu_custom_call.1} parent=11 // pred_check_branch
          %129 = sbr.rel (%p127) target = $region20
        $region19: #{tpu_custom_call.1} parent=11 // pred_region
          _
        $region20: #{tpu_custom_call.1} parent=11 // pred_fallthru
          _
      $region12: #{tpu_custom_call.1} parent=5 // pred_fallthru
        _
      %p130 = scmp.lt.s32.totalorder %s15, 3
      // Predicated region
      $region21: #{tpu_custom_call.1} parent=5 // pred_check
        %p131 = pneg %p130
      $region22: #{tpu_custom_call.1} parent=5 // pred_check_branch
        %133 = sbr.rel (%p131) target = $region24
      $region23: #{tpu_custom_call.1} parent=5 // pred_region
        // Predicated region
        $region25: #{tpu_custom_call.1} parent=23 // pred_check
          %p134 = pneg %p35
        $region26: #{tpu_custom_call.1} parent=23 // pred_check_branch
          %136 = sbr.rel (%p134) target = $region28
        $region27: #{tpu_custom_call.1} parent=23 // pred_region
          %s137 = sand.u32 %s25, 1
          %s138 = scalar_lea.sflag [#allocation3], %s137
          %s139 = sand.u32 %s25, 1
          %s140 = smul.addr %s139, 24
          %s141 = scalar_lea.vmem [#allocation2], %s140
          %s143 = ssub.s32 384, 384
          %144 = vsyncadd %s138, %s143
          %s145 = smul.addr %s15, 128
          %s146 = scalar_lea.hbm %s0, %s145
          %s147 = sshll.u32 %s141, 4
          %s148 = int_to_ptr.vmem [resolvable:$true] %s147
          %153 = dma.hbm_to_vmem [thread:$0]  %s146, 384, %s148, %s138, 384, 128, 8
        $region28: #{tpu_custom_call.1} parent=23 // pred_fallthru
          _
      $region24: #{tpu_custom_call.1} parent=5 // pred_fallthru
        _
      %p154 = scmp.le.s32.totalorder 1, %s15
      %p155 = scmp.lt.s32.totalorder %s15, 4
      %p156 = pnand %p154, %p155
      %p157 = pneg %p156
      // Predicated region
      $region29: #{tpu_custom_call.1} parent=5 // pred_check
        _
      $region30: #{tpu_custom_call.1} parent=5 // pred_check_branch
        %159 = sbr.rel (%p156) target = $region32
      $region31: #{tpu_custom_call.1} parent=5 // pred_region
        %s160 = ssub.s32 %s15, 1
        %s161 = sand.u32 %s28, 1
        %s162 = scalar_lea.sflag [#allocation3], %s161
        %s163 = sand.u32 %s28, 1
        %s164 = smul.addr %s163, 24
        %s165 = scalar_lea.vmem [#allocation2], %s164
        // Predicated region
        $region33: #{tpu_custom_call.1} parent=31 // pred_check
          %p166 = pneg %p41
        $region34: #{tpu_custom_call.1} parent=31 // pred_check_branch
          %168 = sbr.rel (%p166) target = $region36
        $region35: #{tpu_custom_call.1} parent=31 // pred_region
          %169 = dma.done %s162, 384
        $region36: #{tpu_custom_call.1} parent=31 // pred_fallthru
          _
        %s170 = sand.u32 %s28, 1
        %s171 = scalar_lea.sflag [#allocation3], %s170
        %s172 = sand.u32 %s28, 1
        %s173 = smul.addr %s172, 24
        %s174 = scalar_lea.vmem [#allocation2], %s173
        %p175 = pneg %p41
        %p176 = pneg %p38
        %p177 = pneg %p62
        %p178 = pneg %p59
        %p179 = pneg %p83
        %p180 = pneg %p80
        %p181 = pneg %p109
        %p182 = pneg %p106
        %s183 = sand.u32 %s96, 1
        %s184 = scalar_lea.sflag [#allocation4], %s183
        %s185 = sand.u32 %s96, 1
        %s186 = smul.addr %s185, 8
        %s187 = scalar_lea.vmem [#allocation5], %s186
        %v189 = vld [vmem:[%s165] sm:$0xff]
        %v190 = vld [vmem:[%s165 + $0x8] sm:$0xff]
        %v191 = vld [vmem:[%s165 + $0x10] sm:$0xff]
        %v192 = vpack.c.bf16 %v190, %v189
        %v193 = vpack.c.bf16 %v191, %v191
        %v194 = vld [vmem:[%s1] sm:$0xf]
        %v195 = vld [vmem:[%s1 + $0x4] sm:$0xf]
        %v196 = vld [vmem:[%s1 + $0x8] sm:$0xf]
        %v197 = vld [vmem:[%s1 + $0xc] sm:$0xf]
        %v198 = vld [vmem:[%s1 + $0x10] sm:$0xf]
        %v199 = vld [vmem:[%s1 + $0x14] sm:$0xf]
        %v200 = vld [vmem:[%s1 + $0x18] sm:$0xf]
        %v201 = vld [vmem:[%s1 + $0x1c] sm:$0xf]
        %v202 = vld [vmem:[%s1 + $0x20] sm:$0xf]
        %v203 = vld [vmem:[%s1 + $0x24] sm:$0xf]
        %v204 = vld [vmem:[%s1 + $0x28] sm:$0xf]
        %v205 = vld [vmem:[%s1 + $0x2c] sm:$0xf]
        %v206 = vld [vmem:[%s1 + $0x30] sm:$0xf]
        %v207 = vld [vmem:[%s1 + $0x34] sm:$0xf]
        %v208 = vld [vmem:[%s1 + $0x38] sm:$0xf]
        %v209 = vld [vmem:[%s1 + $0x3c] sm:$0xf]
        %v226 = vunpack.c.l.b16 %v194
        %v227 = vunpack.c.l.b16 %v195
        %v228 = vunpack.c.l.b16 %v196
        %v229 = vunpack.c.l.b16 %v197
        %v230 = vunpack.c.l.b16 %v198
        %v231 = vunpack.c.l.b16 %v199
        %v232 = vunpack.c.l.b16 %v200
        %v233 = vunpack.c.l.b16 %v201
        %v234 = vunpack.c.l.b16 %v202
        %v235 = vunpack.c.l.b16 %v203
        %v236 = vunpack.c.l.b16 %v204
        %v237 = vunpack.c.l.b16 %v205
        %v238 = vunpack.c.l.b16 %v206
        %v239 = vunpack.c.l.b16 %v207
        %v240 = vunpack.c.l.b16 %v208
        %v241 = vunpack.c.l.b16 %v209
        %v242 = vpack.c.b16 %v227, %v226
        %v243 = vpack.c.b16 %v229, %v228
        %v244 = vpack.c.b16 %v231, %v230
        %v245 = vpack.c.b16 %v233, %v232
        %v246 = vpack.c.b16 %v235, %v234
        %v247 = vpack.c.b16 %v237, %v236
        %v248 = vpack.c.b16 %v239, %v238
        %v249 = vpack.c.b16 %v241, %v240
        %258 = vmatprep.subr.bf16.mxu0 0
        %259 = vmatpush1.bf16.msra.mxu0 %v242
        %260 = vmatprep.subr.bf16.mxu0 0
        %261 = vmatpush1.bf16.msra.mxu0 %v243
        %262 = vmatprep.subr.bf16.mxu0 0
        %263 = vmatpush1.bf16.msra.mxu0 %v244
        %264 = vmatprep.subr.bf16.mxu0 0
        %265 = vmatpush1.bf16.msra.mxu0 %v245
        %266 = vmatprep.subr.bf16.mxu0 0
        %267 = vmatpush1.bf16.msra.mxu0 %v246
        %268 = vmatprep.subr.bf16.mxu0 0
        %269 = vmatpush1.bf16.msra.mxu0 %v247
        %270 = vmatprep.subr.bf16.mxu0 0
        %271 = vmatpush1.bf16.msra.mxu0 %v248
        %272 = vmatprep.subr.bf16.mxu0 0
        %273 = vmatpush1.bf16.msra.mxu0 %v249
        %274 = vmatprep.subr.bf16.mxu0 0
        %275 = vmatpush1.bf16.msra.mxu0 0
        %276 = vmatprep.subr.bf16.mxu0 0
        %277 = vmatpush1.bf16.msra.mxu0 0
        %278 = vmatprep.subr.bf16.mxu0 0
        %279 = vmatpush1.bf16.msra.mxu0 0
        %280 = vmatprep.subr.bf16.mxu0 0
        %281 = vmatpush1.bf16.msra.mxu0 0
        %282 = vmatprep.subr.bf16.mxu0 0
        %283 = vmatpush1.bf16.msra.mxu0 0
        %284 = vmatprep.subr.bf16.mxu0 0
        %285 = vmatpush1.bf16.msra.mxu0 0
        %286 = vmatprep.subr.bf16.mxu0 0
        %287 = vmatpush1.bf16.msra.mxu0 0
        %288 = vmatprep.subr.bf16.mxu0 0
        %289 = vmatpush1.bf16.msra.mxu0 0
        %290 = vmatprep.mubr.bf16.mxu0 0
        %291 = vmatmul.mubr.bf16.gmra.mrb[0].mxu0 %v192
        %v292 = vpop.f32.mrb[0].mxu0
        %v293 = vadd.f32 0.0, %v292
        %v294 = vpop.f32.mrb[0].mxu0
        %v295 = vpop.f32.mrb[0].mxu0
        %v296 = vadd.f32 0.0, %v295
        %v297 = vpop.f32.mrb[0].mxu0
        %298 = vmatprep.mubr.bf16.mxu0 0
        %299 = vmatmul.mubr.bf16.gmra.mrb[0].mxu0 %v193
        %v300 = vpop.f32.mrb[0].mxu0
        %v301 = vadd.f32 0.0, %v300
        %v302 = vpop.f32.mrb[0].mxu0
        %v303 = vpop.f32.mrb[0].mxu0
        %v304 = vpop.f32.mrb[0].mxu0
        %305 = vdwg.mxu0
        %vm306 = vcmp.ge.f32.partialorder %v293, 0.0
        %vm307 = vcmp.ge.f32.partialorder %v296, 0.0
        %vm308 = vcmp.ge.f32.partialorder %v301, 0.0
        %v309 = vmul.f32 %v293, 0.2
        %v310 = vmul.f32 %v296, 0.2
        %v311 = vmul.f32 %v301, 0.2
        %v312 = vsel %vm306, %v293, %v309
        %v313 = vsel %vm307, %v296, %v310
        %v314 = vsel %vm308, %v301, %v311
        %vm315 = vcmask 31744
        %v316 = vsel %vm315, %v312, -inf
        %v317 = vsel %vm315, %v313, -inf
        %v318 = vsel %vm315, %v314, -inf
        %v319 = vmax.f32 %v316, %v317
        %v320 = vmax.f32 %v319, %v318
        %v321 = vsub.f32 %v312, %v320
        %v322 = vsub.f32 %v313, %v320
        %v323 = vsub.f32 %v314, %v320
        %v324 = vmul.f32 %v321, 1.442695
        %v325 = vpow.pop %v324
        %v326 = vmul.f32 %v322, 1.442695
        %v327 = vpow.pop %v326
        %v328 = vmul.f32 %v323, 1.442695
        %v329 = vpow.pop %v328
        %v330 = vsel %vm315, %v325, 0.0
        %v331 = vsel %vm315, %v327, 0.0
        %v332 = vadd.f32 %v330, %v331
        %v333 = vsel %vm315, %v329, 0.0
        %v334 = vadd.f32 %v332, %v333
        %v335 = vrcp.pop %v334
        %v336 = vmul.f32 %v325, %v335
        %v337 = vmul.f32 %v327, %v335
        %v338 = vmul.f32 %v329, %v335
        %v339 = vpack.c.bf16 %v337, %v336
        %v340 = vpack.c.bf16 %v338, %v338
        %v341 = vld [vmem:[%s2] sm:$0x3]
        %v343 = vsel %vm315, %v339, 0
        %v346 = vsel %vm315, %v340, 0
        %vm348 = vcmask 1041408
        %v350 = vsel %vm348, %v341, 0
        %352 = vmatprep.subr.bf16.mxu0 0
        %353 = vmatpush1.bf16.msra.mxu0 %v350
        %354 = vmatprep.subr.bf16.mxu0 0
        %355 = vmatpush1.bf16.msra.mxu0 0
        %356 = vmatprep.subr.bf16.mxu0 0
        %357 = vmatpush1.bf16.msra.mxu0 0
        %358 = vmatprep.subr.bf16.mxu0 0
        %359 = vmatpush1.bf16.msra.mxu0 0
        %360 = vmatprep.subr.bf16.mxu0 0
        %361 = vmatpush1.bf16.msra.mxu0 0
        %362 = vmatprep.subr.bf16.mxu0 0
        %363 = vmatpush1.bf16.msra.mxu0 0
        %364 = vmatprep.subr.bf16.mxu0 0
        %365 = vmatpush1.bf16.msra.mxu0 0
        %366 = vmatprep.subr.bf16.mxu0 0
        %367 = vmatpush1.bf16.msra.mxu0 0
        %368 = vmatprep.subr.bf16.mxu0 0
        %369 = vmatpush1.bf16.msra.mxu0 0
        %370 = vmatprep.subr.bf16.mxu0 0
        %371 = vmatpush1.bf16.msra.mxu0 0
        %372 = vmatprep.subr.bf16.mxu0 0
        %373 = vmatpush1.bf16.msra.mxu0 0
        %374 = vmatprep.subr.bf16.mxu0 0
        %375 = vmatpush1.bf16.msra.mxu0 0
        %376 = vmatprep.subr.bf16.mxu0 0
        %377 = vmatpush1.bf16.msra.mxu0 0
        %378 = vmatprep.subr.bf16.mxu0 0
        %379 = vmatpush1.bf16.msra.mxu0 0
        %380 = vmatprep.subr.bf16.mxu0 0
        %381 = vmatpush1.bf16.msra.mxu0 0
        %382 = vmatprep.subr.bf16.mxu0 0
        %383 = vmatpush1.bf16.msra.mxu0 0
        %384 = vmatprep.mubr.bf16.mxu0 0
        %385 = vmatmul.mubr.bf16.gmra.mrb[0].mxu0 %v343
        %v386 = vpop.f32.mrb[0].mxu0
        %v387 = vadd.f32 0.0, %v386
        %v388 = vpop.f32.mrb[0].mxu0
        %v389 = vpop.f32.mrb[0].mxu0
        %v390 = vadd.f32 0.0, %v389
        %v391 = vpop.f32.mrb[0].mxu0
        %392 = vmatprep.mubr.bf16.mxu0 0
        %393 = vmatmul.mubr.bf16.gmra.mrb[0].mxu0 %v346
        %v394 = vpop.f32.mrb[0].mxu0
        %v395 = vadd.f32 0.0, %v394
        %v396 = vpop.f32.mrb[0].mxu0
        %v397 = vpop.f32.mrb[0].mxu0
        %v398 = vpop.f32.mrb[0].mxu0
        %399 = vdwg.mxu0
        %v400 = vmul.f32 %v189, %v387
        %v401 = vmul.f32 %v190, %v390
        %v402 = vmul.f32 %v191, %v395
        %v403 = vadd.f32 %v400, %v401
        %v404 = vadd.f32 %v403, %v402
        %405 = vst [vmem:[%s187] sm:$0xff] %v404
        %s406 = sand.u32 %s96, 1
        %s407 = scalar_lea.sflag [#allocation4], %s406
        %s408 = sand.u32 %s96, 1
        %s409 = smul.addr %s408, 8
        %s410 = scalar_lea.vmem [#allocation5], %s409
        // Predicated region
        $region37: #{tpu_custom_call.1} parent=31 // pred_check
          %p411 = pneg %p106
        $region38: #{tpu_custom_call.1} parent=31 // pred_check_branch
          %413 = sbr.rel (%p411) target = $region40
        $region39: #{tpu_custom_call.1} parent=31 // pred_region
          %s415 = ssub.s32 128, 128
          %416 = vsyncadd %s407, %s415
          %s417 = smul.addr %s20, 128
          %s418 = scalar_lea.hbm %s3, %s417
          %s420 = sshll.u32 %s410, 4
          %s421 = int_to_ptr.vmem [resolvable:$true] %s420
          %423 = dma.vmem_to_hbm [thread:$0]  %s421, 128, %s418, %s407
        $region40: #{tpu_custom_call.1} parent=31 // pred_fallthru
          _
      $region32: #{tpu_custom_call.1} parent=5 // pred_fallthru
        _
      %p424 = scmp.le.s32.totalorder 2, %s15
      // Predicated region
      $region41: #{tpu_custom_call.1} parent=5 // pred_check
        %p425 = pneg %p424
      $region42: #{tpu_custom_call.1} parent=5 // pred_check_branch
        %427 = sbr.rel (%p425) target = $region44
      $region43: #{tpu_custom_call.1} parent=5 // pred_region
        %s428 = ssub.s32 %s15, 2
        // Predicated region
        $region45: #{tpu_custom_call.1} parent=43 // pred_check
          %p429 = pneg %p112
        $region46: #{tpu_custom_call.1} parent=43 // pred_check_branch
          %431 = sbr.rel (%p429) target = $region48
        $region47: #{tpu_custom_call.1} parent=43 // pred_region
          %s432 = sand.u32 %s97, 1
          %s433 = scalar_lea.sflag [#allocation4], %s432
          %s434 = sand.u32 %s97, 1
          %s435 = smul.addr %s434, 8
          %s436 = scalar_lea.vmem [#allocation5], %s435
          %437 = dma.done %s433, 128
        $region48: #{tpu_custom_call.1} parent=43 // pred_fallthru
          _
      $region44: #{tpu_custom_call.1} parent=5 // pred_fallthru
        _
    $region6: #{tpu_custom_call.1} parent=1 // loop_footer
      %s19 = sadd.s32 1, %s15
    $region7: #{tpu_custom_call.1} parent=1 // loop_footer_branch
      %14 = sbr.rel target = $region3
    $region8: #{tpu_custom_call.1} parent=1 // loop_exit
      _
    %438 = vsyncpa [#allocation3], 1
    %s439 = scalar_lea.sflag [#allocation3], 1
    %440 = vsyncpa %s439, 1
    %441 = vsyncpa [#allocation4], 1
    %s442 = scalar_lea.sflag [#allocation4], 1
    %443 = vsyncpa %s442, 1

</llo_original>
